<compile_context>
chip_gen: v6e
topology: v6e:2x2x1
jax: 0.10.0
libtpu: 0.0.40
codegen_flags: <defaults>
</compile_context>

<pallas_src>
import functools

import jax
import jax.numpy as jnp
from jax.experimental import pallas as pl
from jax.experimental.pallas import tpu as pltpu

_LANES = 128


def _round_up(v, m):
    return ((v + m - 1) // m) * m


def _round_down(v, m):
    return (v // m) * m


def _tensorcores_per_chip():
    """Best-effort TensorCore count. v7x has 2 TCs/chip; v5e/v6e have 1.

    Unknown / future chips default to 2: an unnecessary second slice on a 1-TC
    chip only costs one extra scalar writeback, whereas a missing second slice
    on a 2-TC chip costs up to 2x wall-clock.
    """
    try:
        kind = jax.devices()[0].device_kind.lower()
    except Exception:  # defensive: never fail the wrapper on introspection
        return 2
    if any(s in kind for s in ("v5e", "v5 lite", "v5lite", "v6e", "v6 lite", "v6lite")):
        return 1
    return 2


def _bce_sum_kernel(x_ref, y_ref, out_ref, acc_ref, *, total_elems, tile_rows,
                    acc_rows, steps_per_slice, num_tiles, mask_needed):
    p = pl.program_id(0)           # row-slice ("parallel") axis
    i = pl.program_id(1)           # reduction ("arbitrary") axis
    t = p * steps_per_slice + i    # global (unclamped) tile index

    @pl.when(i == 0)
    def _():
        acc_ref[...] = jnp.zeros_like(acc_ref)

    x = x_ref[...].astype(jnp.float32)
    y = y_ref[...].astype(jnp.float32)

    # Numerically stable BCE-with-logits (same formulation as PyTorch):
    # exactly one exp + one log1p per element (the single EUP slot is the
    # likely ceiling on v7x once HBM stops being the bottleneck, so no extra
    # transcendental re-expressions).
    per = jnp.maximum(x, 0.0) - x * y + jnp.log1p(jnp.exp(-jnp.abs(x)))

    def accumulate(vals):
        # Fold the row tile into the (acc_rows, 128) accumulator: pure
        # elementwise vreg adds (VPU) with an 8x shorter dependency chain than
        # a single (8,128) accumulator.  The one cross-lane/sublane reduce
        # happens once per slice, at the end.
        acc_ref[...] += vals.reshape(tile_rows // acc_rows, acc_rows, _LANES).sum(axis=0)

    if mask_needed:
        # Steady state: no masking work at all.
        @pl.when(t < num_tiles - 1)
        def _():
            accumulate(per)

        # Last real tile (partial rows / 128-pad tail) and the phantom tile of
        # the short slice: select-mask on the flat element index.  Keep this a
        # jnp.where select (NOT per * mask) so garbage in clipped rows can
        # never propagate into the sum.
        @pl.when(t >= num_tiles - 1)
        def _():
            row = jax.lax.broadcasted_iota(jnp.int32, per.shape, 0) + t * tile_rows
            lane = jax.lax.broadcasted_iota(jnp.int32, per.shape, 1)
            flat = row * _LANES + lane
            accumulate(jnp.where(flat < total_elems, per, 0.0))
    else:
        accumulate(per)

    @pl.when(i == pl.num_programs(1) - 1)
    def _():
        out_ref[0, 0] = jnp.sum(acc_ref[...])


def age_bce_loss(output, target):
    """Pallas equivalent of AgeBCELoss().forward(output, target).

    nn.BCEWithLogitsLoss(size_average=True) -> legacy 'mean' reduction: the
    mean over all elements of the stable BCE-with-logits.  Returns a float32
    scalar.
    """
    assert output.shape == target.shape
    isx = jnp.dtype(output.dtype).itemsize
    isy = jnp.dtype(target.dtype).itemsize
    total = 1
    for d in output.shape:
        total *= d

    # Lane-dense repack: view the whole problem as (M, 128).
    m_rows = -(-total // _LANES)
    padded = m_rows * _LANES
    x1 = output.reshape(-1)
    y1 = target.reshape(-1)
    if padded != total:
        x1 = jnp.pad(x1, (0, padded - total))
        y1 = jnp.pad(y1, (0, padded - total))
    x2 = x1.reshape(m_rows, _LANES)
    y2 = y1.reshape(m_rows, _LANES)

    # Sublane quantum from the *narrowest* dtype (f32 -> 8, bf16 -> 16, 8-bit -> 32).
    sub = max(8, 32 // min(isx, isy))

    # Tile sizing: 16 MiB budget for the pipelined input buffers
    # (2 inputs x 2 pipeline buffers, real itemsizes), capped at 4096 rows
    # (2 MiB f32 working value per block) so in-kernel f32 intermediates stay
    # comfortably inside scoped VMEM on v7x (64 MiB per TensorCore).
    budget_bytes = 16 * 1024 * 1024
    bytes_per_row = 2 * _LANES * (isx + isy)
    max_rows = min(budget_bytes // bytes_per_row, 4096)
    max_rows = max(sub, _round_down(max_rows, 64))

    if _round_up(m_rows, sub) <= max_rows:
        tile_rows = _round_up(m_rows, sub)        # single tile covers everything
    else:
        tile_rows = max_rows                      # multiple of 64 (and of sub)
    num_tiles = -(-m_rows // tile_rows)
    acc_rows = 64 if tile_rows % 64 == 0 else tile_rows

    # Engage both TensorCores on multi-TC chips whenever there is >1 tile; an
    # odd tile count gets a clamped, fully-masked phantom tile on the short
    # slice so neither core idles.
    num_slices = 2 if (num_tiles >= 2 and _tensorcores_per_chip() >= 2) else 1
    steps_per_slice = -(-num_tiles // num_slices)
    has_phantom = num_slices * steps_per_slice > num_tiles
    mask_needed = (num_tiles * tile_rows * _LANES != total) or has_phantom

    kernel = functools.partial(
        _bce_sum_kernel,
        total_elems=total,
        tile_rows=tile_rows,
        acc_rows=acc_rows,
        steps_per_slice=steps_per_slice,
        num_tiles=num_tiles,
        mask_needed=mask_needed,
    )

    # Clamp so the phantom tile re-reads the last real tile; its contribution
    # is zero-masked in-kernel.
    def in_map(p, i):
        return (jnp.minimum(p * steps_per_slice + i, num_tiles - 1), 0)

    cost = pl.CostEstimate(
        flops=6 * total,
        transcendentals=2 * total,
        bytes_accessed=padded * (isx + isy) + 4 * num_slices,
    )

    partial_sums = pl.pallas_call(
        kernel,
        out_shape=jax.ShapeDtypeStruct((num_slices, 1), jnp.float32),
        grid_spec=pltpu.PrefetchScalarGridSpec(
            num_scalar_prefetch=0,
            grid=(num_slices, steps_per_slice),
            in_specs=[
                pl.BlockSpec((tile_rows, _LANES), in_map),
                pl.BlockSpec((tile_rows, _LANES), in_map),
            ],
            out_specs=pl.BlockSpec((1, 1), lambda p, i: (p, 0),
                                   memory_space=pltpu.SMEM),
            scratch_shapes=[pltpu.VMEM((acc_rows, _LANES), jnp.float32)],
        ),
        compiler_params=pltpu.CompilerParams(
            dimension_semantics=("parallel", "arbitrary"),
            vmem_limit_bytes=48 * 1024 * 1024,
        ),
        cost_estimate=cost,
    )(x2, y2)

    # TODO(synk): for extremely large N*C, bit-exact agreement with an f64
    # reference would require summing the per-slice partials in f64 here; f32
    # is ample for this loss's operating range.
    return jnp.sum(partial_sums) / jnp.float32(total)


def _reference(output, target):
    x = output.astype(jnp.float32).reshape(-1)
    y = target.astype(jnp.float32).reshape(-1)
    per = jnp.maximum(x, 0.0) - x * y + jnp.log1p(jnp.exp(-jnp.abs(x)))
    return jnp.mean(per)


if __name__ == "__main__":
    key = jax.random.PRNGKey(0)
    ks = jax.random.split(key, 8)

    # (batch, num_age_bins) logits/targets, as AgeBCELoss is applied to.
    cases = [
        ((16, 40), jnp.float32),     # tiny, single block, lane-tail masking
        ((21, 37), jnp.float32),     # numel not a multiple of 128 -> pad path
        ((64, 40), jnp.bfloat16),    # bf16 (16,128) sublane tiling
        ((8300, 130), jnp.float32),  # multi-tile: steady state + tail (+ phantom on 2-TC chips)
    ]

    idx = 0
    for shape, dt in cases:
        k1, k2 = ks[idx], ks[idx + 1]
        idx += 2
        logits = jax.random.normal(k1, shape, dtype=jnp.float32).astype(dt)
        targets = (jax.random.uniform(k2, shape) > 0.5).astype(dt)

        loss = age_bce_loss(logits, targets)
        jax.block_until_ready(loss)
        ref = _reference(logits, targets)
        assert jnp.allclose(loss, ref, rtol=1e-4, atol=1e-5), (shape, dt, loss, ref)

    print("KERNEL_OK")
</pallas_src>

<mosaic_0001>
module attributes {stable_mosaic.version = 11 : i64} {
  func.func @_bce_sum_kernel(%arg0: i32, %arg1: i32, %arg2: memref<8x128xf32, #tpu.memory_space<vmem>>, %arg3: memref<8x128xf32, #tpu.memory_space<vmem>>, %arg4: memref<1x1xf32, #tpu.memory_space<smem>>, %arg5: memref<8x128xf32, #tpu.memory_space<vmem>>) attributes {dimension_semantics = [#tpu.dimension_semantics<parallel>, #tpu.dimension_semantics<arbitrary>], iteration_bounds = array<i64: 1, 1>, scalar_prefetch = 0 : i64, scratch_operands = 1 : i64, tpu.core_type = #tpu.core_type<tc>, window_params = [{transform_indices = @transform_0, window_bounds = array<i64: 8, 128>}, {transform_indices = @transform_1, window_bounds = array<i64: 8, 128>}, {transform_indices = @transform_2, window_bounds = array<i64: 1, 1>}]} {
    %c1_i32 = arith.constant 1 : i32
    %0 = arith.muli %arg0, %c1_i32 : i32
    %1 = arith.addi %0, %arg1 : i32
    %c0_i32 = arith.constant 0 : i32
    %2 = arith.cmpi eq, %arg1, %c0_i32 : i32
    %3 = arith.extui %2 : i1 to i32
    %c0_i32_0 = arith.constant 0 : i32
    %4 = arith.cmpi ne, %3, %c0_i32_0 : i32
    scf.if %4 {
      %cst_11 = arith.constant 0.000000e+00 : f32
      %26 = vector.broadcast %cst_11 : f32 to vector<8x128xf32>
      %c0_12 = arith.constant 0 : index
      %c0_13 = arith.constant 0 : index
      %27 = vector.load %arg5[%c0_12, %c0_13] : memref<8x128xf32, #tpu.memory_space<vmem>>, vector<8x128xf32>
      tpu.vector_store %arg5[%c0_12, %c0_13], %26 {strides = array<i32>} : memref<8x128xf32, #tpu.memory_space<vmem>>, vector<8x128xf32>,
    } else {
    }
    %c0 = arith.constant 0 : index
    %c0_1 = arith.constant 0 : index
    %5 = vector.load %arg2[%c0, %c0_1] : memref<8x128xf32, #tpu.memory_space<vmem>>, vector<8x128xf32>
    %c0_2 = arith.constant 0 : index
    %c0_3 = arith.constant 0 : index
    %6 = vector.load %arg3[%c0_2, %c0_3] : memref<8x128xf32, #tpu.memory_space<vmem>>, vector<8x128xf32>
    %cst = arith.constant 0.000000e+00 : f32
    %7 = vector.broadcast %cst : f32 to vector<8x128xf32>
    %8 = arith.maximumf %5, %7 : vector<8x128xf32>
    %9 = arith.mulf %5, %6 : vector<8x128xf32>
    %10 = arith.subf %8, %9 : vector<8x128xf32>
    %11 = math.absf %5 : vector<8x128xf32>
    %cst_4 = arith.constant 0.000000e+00 : f32
    %12 = vector.broadcast %cst_4 : f32 to vector<8x128xf32>
    %13 = arith.subf %12, %11 : vector<8x128xf32>
    %14 = math.exp %13 : vector<8x128xf32>
    %15 = math.log1p %14 : vector<8x128xf32>
    %16 = arith.addf %10, %15 : vector<8x128xf32>
    %c0_i32_5 = arith.constant 0 : i32
    %17 = arith.cmpi slt, %1, %c0_i32_5 : i32
    %18 = arith.extui %17 : i1 to i32
    %c0_i32_6 = arith.constant 0 : i32
    %19 = arith.cmpi ne, %18, %c0_i32_6 : i32
    scf.if %19 {
      %c0_11 = arith.constant 0 : index
      %c0_12 = arith.constant 0 : index
      %26 = vector.load %arg5[%c0_11, %c0_12] : memref<8x128xf32, #tpu.memory_space<vmem>>, vector<8x128xf32>
      %27 = vector.shape_cast %16 : vector<8x128xf32> to vector<1x8x128xf32>
      %cst_13 = arith.constant dense<0.000000e+00> : vector<8x128xf32>
      %28 = vector.multi_reduction <add>, %27, %cst_13 [0] : vector<1x8x128xf32> to vector<8x128xf32>
      %29 = arith.addf %26, %28 : vector<8x128xf32>
      %c0_14 = arith.constant 0 : index
      %c0_15 = arith.constant 0 : index
      %30 = vector.load %arg5[%c0_14, %c0_15] : memref<8x128xf32, #tpu.memory_space<vmem>>, vector<8x128xf32>
      tpu.vector_store %arg5[%c0_14, %c0_15], %29 {strides = array<i32>} : memref<8x128xf32, #tpu.memory_space<vmem>>, vector<8x128xf32>,
    } else {
    }
    %c0_i32_7 = arith.constant 0 : i32
    %20 = arith.cmpi sge, %1, %c0_i32_7 : i32
    %21 = arith.extui %20 : i1 to i32
    %c0_i32_8 = arith.constant 0 : i32
    %22 = arith.cmpi ne, %21, %c0_i32_8 : i32
    scf.if %22 {
      %26 = tpu.iota {dimensions = array<i32: 0>} : vector<8x128xi32>
      %c8_i32 = arith.constant 8 : i32
      %27 = arith.muli %1, %c8_i32 : i32
      %28 = vector.broadcast %27 : i32 to vector<8x128xi32>
      %29 = arith.addi %26, %28 : vector<8x128xi32>
      %30 = tpu.iota {dimensions = array<i32: 1>} : vector<8x128xi32>
      %c128_i32 = arith.constant 128 : i32
      %31 = vector.broadcast %c128_i32 : i32 to vector<8x128xi32>
      %32 = arith.muli %29, %31 : vector<8x128xi32>
      %33 = arith.addi %32, %30 : vector<8x128xi32>
      %c640_i32 = arith.constant 640 : i32
      %34 = vector.broadcast %c640_i32 : i32 to vector<8x128xi32>
      %35 = arith.cmpi slt, %33, %34 : vector<8x128xi32>
      %cst_11 = arith.constant 0.000000e+00 : f32
      %36 = vector.broadcast %cst_11 : f32 to vector<8x128xf32>
      %37 = arith.select %35, %16, %36 : vector<8x128xi1>, vector<8x128xf32>
      %c0_12 = arith.constant 0 : index
      %c0_13 = arith.constant 0 : index
      %38 = vector.load %arg5[%c0_12, %c0_13] : memref<8x128xf32, #tpu.memory_space<vmem>>, vector<8x128xf32>
      %39 = vector.shape_cast %37 : vector<8x128xf32> to vector<1x8x128xf32>
      %cst_14 = arith.constant dense<0.000000e+00> : vector<8x128xf32>
      %40 = vector.multi_reduction <add>, %39, %cst_14 [0] : vector<1x8x128xf32> to vector<8x128xf32>
      %41 = arith.addf %38, %40 : vector<8x128xf32>
      %c0_15 = arith.constant 0 : index
      %c0_16 = arith.constant 0 : index
      %42 = vector.load %arg5[%c0_15, %c0_16] : memref<8x128xf32, #tpu.memory_space<vmem>>, vector<8x128xf32>
      tpu.vector_store %arg5[%c0_15, %c0_16], %41 {strides = array<i32>} : memref<8x128xf32, #tpu.memory_space<vmem>>, vector<8x128xf32>,
    } else {
    }
    %c0_i32_9 = arith.constant 0 : i32
    %23 = arith.cmpi eq, %arg1, %c0_i32_9 : i32
    %24 = arith.extui %23 : i1 to i32
    %c0_i32_10 = arith.constant 0 : i32
    %25 = arith.cmpi ne, %24, %c0_i32_10 : i32
    scf.if %25 {
      %c0_11 = arith.constant 0 : index
      %c0_12 = arith.constant 0 : index
      %26 = vector.load %arg5[%c0_11, %c0_12] : memref<8x128xf32, #tpu.memory_space<vmem>>, vector<8x128xf32>
      %27 = vector.shape_cast %26 : vector<8x128xf32> to vector<1x8x128xf32>
      %cst_13 = arith.constant dense<0.000000e+00> : vector<1xf32>
      %28 = vector.multi_reduction <add>, %27, %cst_13 [1, 2] : vector<1x8x128xf32> to vector<1xf32>
      %29 = vector.shape_cast %28 : vector<1xf32> to vector<1x1x1xf32>
      %30 = vector.extract %29[0, 0, 0] : f32 from vector<1x1x1xf32>
      %c0_14 = arith.constant 0 : index
      %c0_15 = arith.constant 0 : index
      %31 = memref.load %arg4[%c0_14, %c0_15] : memref<1x1xf32, #tpu.memory_space<smem>>
      memref.store %30, %arg4[%c0_14, %c0_15] : memref<1x1xf32, #tpu.memory_space<smem>>
    } else {
    }
    return
  }
  func.func @transform_0(%arg0: i32, %arg1: i32) -> (i32, i32) {
    %c1_i32 = arith.constant 1 : i32
    %0 = arith.muli %arg0, %c1_i32 : i32
    %1 = arith.addi %0, %arg1 : i32
    %c0_i32 = arith.constant 0 : i32
    %2 = arith.minsi %1, %c0_i32 : i32
    %c0_i32_0 = arith.constant 0 : i32
    %c0_i32_1 = arith.constant 0 : i32
    return %2, %c0_i32_0 : i32, i32
  }
  func.func @transform_1(%arg0: i32, %arg1: i32) -> (i32, i32) {
    %c1_i32 = arith.constant 1 : i32
    %0 = arith.muli %arg0, %c1_i32 : i32
    %1 = arith.addi %0, %arg1 : i32
    %c0_i32 = arith.constant 0 : i32
    %2 = arith.minsi %1, %c0_i32 : i32
    %c0_i32_0 = arith.constant 0 : i32
    %c0_i32_1 = arith.constant 0 : i32
    return %2, %c0_i32_0 : i32, i32
  }
  func.func @transform_2(%arg0: i32, %arg1: i32) -> (i32, i32) {
    %c0_i32 = arith.constant 0 : i32
    %c0_i32_0 = arith.constant 0 : i32
    return %arg0, %c0_i32 : i32, i32
  }
}

</mosaic_0001>

<llo_original>
// kernel: tpu_custom_call.1
$region0: #{tpu_custom_call.1}
  #allocation0 [shape = 'u32[]', space=smem, size = 0x4, offset = 0x4, fixed_abs, tag = 'smem constant byte address 0x4 - core index']
  #allocation1 [shape = 'u32[144,128]{1,0:T(1,128)}', space=vmem, size = 0x12000, scoped, tag = 'internal scratch']
  #allocation2 [shape = 'f32[8,128]{1,0:T(8,128)}', space=vmem, size = 0x1000, scoped, tag = 'scratch operand']
  %s0 = inlined_call_operand.hbm [shape: f32[5,128], index: 0, kind: input, shape index: {}]
  %s1 = inlined_call_operand.hbm [shape: f32[5,128], index: 1, kind: input, shape index: {}]
  %s2 = inlined_call_operand.hbm [shape: f32[1,1], index: 2, kind: output, shape index: {}]
  %s3 = sld [smem:[#allocation0]]
  $region42: #{tpu_custom_call.1} parent=0
    _
  %s5 = ssub.s32 1, %s3
  %s6 = scalar_select 0, %s5, %s3
  $region1: #{tpu_custom_call.1} parent=0
    #allocation3 [shape = 'u8[4096]{0}', space=vmem, size = 0x1000, scoped, tag = 'input window, operand 0, single buffered']
    #allocation4 [shape = 's32[1]{0}', space=sflag, size = 0x4, scoped, tag = 'scoped memory for tpu_custom_call.1']
    #allocation5 [shape = 's32[1]{0}', space=sflag, size = 0x4, scoped, tag = 'scoped memory for tpu_custom_call.1']
    #allocation6 [shape = 'u8[4096]{0}', space=vmem, size = 0x1000, scoped, tag = 'input window, operand 1, single buffered']
    #allocation7 [shape = 's32[1]{0}', space=sflag, size = 0x4, scoped, tag = 'scoped memory for tpu_custom_call.1']
    #allocation8 [shape = 'u8[512]{0}', space=smem, size = 0x200, scoped, tag = 'output window, operand 0, single buffered']
    %7 = vsyncpa [#allocation4], 0
    %8 = vsyncpa [#allocation7], 0
    %9 = vsyncpa [#allocation5], 0
    // Predicated region
    $region2: #{tpu_custom_call.1} parent=1 // pred_check
      _
    $region3: #{tpu_custom_call.1} parent=1 // pred_check_branch
      %11 = sbr.rel (0) target = $region5
    $region4: #{tpu_custom_call.1} parent=1 // pred_region
      %s12 = sadd.s32 0, 0
      %p13 = scmp.lt.s32.totalorder %s12, 0
      %s14 = scalar_select %p13, %s12, 0
      %s16 = ssub.s32 128, 128
      %17 = vsyncadd [#allocation4], %s16
      %s18 = smul.addr %s14, 128
      %s19 = scalar_lea.hbm %s0, %s18
      %s21 = sshll.u32 [#allocation3], 4
      %s22 = int_to_ptr.vmem [resolvable:$true] %s21
      %24 = dma.hbm_to_vmem [thread:$0]  %s19, 128, %s22, [#allocation4]
    $region5: #{tpu_custom_call.1} parent=1 // pred_fallthru
      _
    // Predicated region
    $region6: #{tpu_custom_call.1} parent=1 // pred_check
      _
    $region7: #{tpu_custom_call.1} parent=1 // pred_check_branch
      %26 = sbr.rel (0) target = $region9
    $region8: #{tpu_custom_call.1} parent=1 // pred_region
      %s27 = sadd.s32 0, 0
      %p28 = scmp.lt.s32.totalorder %s27, 0
      %s29 = scalar_select %p28, %s27, 0
      %s31 = ssub.s32 128, 128
      %32 = vsyncadd [#allocation7], %s31
      %s33 = smul.addr %s29, 128
      %s34 = scalar_lea.hbm %s1, %s33
      %s36 = sshll.u32 [#allocation6], 4
      %s37 = int_to_ptr.vmem [resolvable:$true] %s36
      %39 = dma.hbm_to_vmem [thread:$0]  %s34, 128, %s37, [#allocation7]
    $region9: #{tpu_custom_call.1} parent=1 // pred_fallthru
      _
    // Predicated region
    $region10: #{tpu_custom_call.1} parent=1 // pred_check
      _
    $region11: #{tpu_custom_call.1} parent=1 // pred_check_branch
      %41 = sbr.rel (0) target = $region13
    $region12: #{tpu_custom_call.1} parent=1 // pred_region
      %42 = dma.done [#allocation4], 128
    $region13: #{tpu_custom_call.1} parent=1 // pred_fallthru
      _
    // Predicated region
    $region14: #{tpu_custom_call.1} parent=1 // pred_check
      _
    $region15: #{tpu_custom_call.1} parent=1 // pred_check_branch
      %44 = sbr.rel (0) target = $region17
    $region16: #{tpu_custom_call.1} parent=1 // pred_region
      %45 = dma.done [#allocation7], 128
    $region17: #{tpu_custom_call.1} parent=1 // pred_fallthru
      _
    %s46 = sadd.s32 0, 0
    %p47 = scmp.lt.s32.totalorder %s46, 0
    %s48 = scalar_select %p47, %s46, 0
    %s49 = sadd.s32 0, 0
    %p50 = scmp.lt.s32.totalorder %s49, 0
    %s51 = scalar_select %p50, %s49, 0
    %s52 = sadd.s32 0, 0
    %p53 = scmp.eq.s32.totalorder 0, 0
    // Predicated region
    $region18: #{tpu_custom_call.1} parent=1 // pred_check
      %p54 = pneg %p53
    $region19: #{tpu_custom_call.1} parent=1 // pred_check_branch
      %56 = sbr.rel (%p54) target = $region21
    $region20: #{tpu_custom_call.1} parent=1 // pred_region
      %57 = vst [vmem:[#allocation2] sm:$0xff] 0.0
    $region21: #{tpu_custom_call.1} parent=1 // pred_fallthru
      _
    %v58 = vld [vmem:[#allocation3] sm:$0xff]
    %v59 = vld [vmem:[#allocation6] sm:$0xff]
    %v60 = vmax.f32 %v58, 0.0
    %v61 = vmul.f32 %v58, %v59
    %v62 = vsub.f32 %v60, %v61
    %v63 = vand.u32 2147483647, %v58
    %v64 = vsub.f32 0.0, %v63
    %v65 = vmul.f32 %v64, 1.442695
    %v66 = vpow.pop %v65
    %v67 = vadd.f32 %v66, 1.0
    %v68 = vlog2.pop %v67
    %v69 = vmul.f32 %v68, 0.6931472
    %v70 = vmul.f32 -0.5, %v66
    %v71 = vadd.f32 %v70, 1.0
    %v72 = vmul.f32 %v71, %v66
    %v73 = vand.u32 2147483647, %v66
    %vm74 = vcmp.lt.f32.partialorder %v73, 0.0004427343
    %v75 = vsel %vm74, %v72, %v69
    %v76 = vadd.f32 %v62, %v75
    %p77 = scmp.lt.s32.totalorder %s52, 0
    // Predicated region
    $region22: #{tpu_custom_call.1} parent=1 // pred_check
      %p78 = pneg %p77
    $region23: #{tpu_custom_call.1} parent=1 // pred_check_branch
      %80 = sbr.rel (%p78) target = $region25
    $region24: #{tpu_custom_call.1} parent=1 // pred_region
      %v81 = vld [vmem:[#allocation2] sm:$0xff]
      %v82 = vadd.f32 %v76, 0.0
      %v83 = vadd.f32 %v81, %v82
      %84 = vst [vmem:[#allocation2] sm:$0xff] %v83
    $region25: #{tpu_custom_call.1} parent=1 // pred_fallthru
      _
    %p85 = scmp.ge.s32.totalorder %s52, 0
    // Predicated region
    $region26: #{tpu_custom_call.1} parent=1 // pred_check
      %p86 = pneg %p85
    $region27: #{tpu_custom_call.1} parent=1 // pred_check_branch
      %88 = sbr.rel (%p86) target = $region29
    $region28: #{tpu_custom_call.1} parent=1 // pred_region
      %v89 = vlaneseq
      %v90 = vshrl.u32 %v89, 7
      %s91 = smul.u32 %s52, 8
      %v92 = vstv %s91
      %v93 = vadd.s32 %v90, %v92
      %v94 = vlaneseq
      %v95 = vand.u32 %v94, 127
      %v96 = vmul.u32 %v93, 128
      %v97 = vadd.s32 %v96, %v95
      %vm98 = vcmp.lt.s32.totalorder %v97, 640
      %v99 = vsel %vm98, %v76, 0.0
      %v100 = vld [vmem:[#allocation2] sm:$0xff]
      %v101 = vadd.f32 %v99, 0.0
      %v102 = vadd.f32 %v100, %v101
      %103 = vst [vmem:[#allocation2] sm:$0xff] %v102
    $region29: #{tpu_custom_call.1} parent=1 // pred_fallthru
      _
    // Predicated region
    $region30: #{tpu_custom_call.1} parent=1 // pred_check
      %p104 = pneg %p53
    $region31: #{tpu_custom_call.1} parent=1 // pred_check_branch
      %106 = sbr.rel (%p104) target = $region33
    $region32: #{tpu_custom_call.1} parent=1 // pred_region
      %v107 = vld [vmem:[#allocation2] sm:$0xff]
      %108 = vadd.xlane.f32.xlu0 %v107
      %v109 = vpop.xlane.xlu0 %108
      %v110 = vrot.slane %v109, 4
      %v111 = vadd.f32 %v109, %v110
      %v112 = vrot.slane %v111, 2
      %v113 = vadd.f32 %v111, %v112
      %v114 = vrot.slane %v113, 1
      %v115 = vadd.f32 %v113, %v114
      %s116 = vtos %v115
      %s117 = scalar_lea.smem [#allocation8], 0
      %118 = sst [smem:[%s117]] %s116
    $region33: #{tpu_custom_call.1} parent=1 // pred_fallthru
      _
    // Predicated region
    $region34: #{tpu_custom_call.1} parent=1 // pred_check
      _
    $region35: #{tpu_custom_call.1} parent=1 // pred_check_branch
      %120 = sbr.rel (0) target = $region37
    $region36: #{tpu_custom_call.1} parent=1 // pred_region
      %s122 = ssub.s32 16, 16
      %123 = vsyncadd [#allocation5], %s122
      %126 = dma.smem_to_hbm [#allocation8], 16, %s2, [#allocation5]
    $region37: #{tpu_custom_call.1} parent=1 // pred_fallthru
      _
    // Predicated region
    $region38: #{tpu_custom_call.1} parent=1 // pred_check
      _
    $region39: #{tpu_custom_call.1} parent=1 // pred_check_branch
      %128 = sbr.rel (0) target = $region41
    $region40: #{tpu_custom_call.1} parent=1 // pred_region
      %129 = dma.done [#allocation5], 16
    $region41: #{tpu_custom_call.1} parent=1 // pred_fallthru
      _
    %130 = sfence
    %131 = vsyncpa [#allocation4], 1
    %132 = vsyncpa [#allocation7], 1
    %133 = vsyncpa [#allocation5], 1

</llo_original>
